<compile_context>
chip_gen: v5e
topology: v5e:2x2
jax: 0.10.0
libtpu: 0.0.40
codegen_flags: <defaults>
</compile_context>

<pallas_src>
import jax
import jax.numpy as jnp
from jax.experimental import pallas as pl
from jax.experimental.pallas import tpu as pltpu


def _convt1x1_kernel(w_ref, b_ref, x_ref, o_ref):
    # w_ref: SMEM (C_out*C_in,) f32, flattened as w[co*C_in + ci]
    # b_ref: SMEM (C_out,)       f32
    # x_ref: VMEM (1, C_in,  TR, 128)
    # o_ref: VMEM (1, C_out, TR, 128)
    c_in = x_ref.shape[1]
    c_out = o_ref.shape[1]

    # Tiny static loops (3x3). Each x_ref[0, ci] is a dense (TR, 128) slab; the whole
    # per-output-channel expression is streamed vreg-by-vreg (no big live tile).
    for co in range(c_out):
        acc = x_ref[0, 0].astype(jnp.float32) * w_ref[co * c_in + 0] + b_ref[co]
        for ci in range(1, c_in):
            acc = acc + x_ref[0, ci].astype(jnp.float32) * w_ref[co * c_in + ci]
        o_ref[0, co] = acc.astype(o_ref.dtype)  # full-slab, unmasked stores


def conv_transpose2d_1x1(x_nchw, weight, bias, *, max_tile_rows=512, min_blocks=4):
    """x_nchw: (N, C_in, H, W); weight: (C_in, C_out, 1, 1) [PyTorch ConvTranspose2d
    layout]; bias: (C_out,). Returns (N, C_out, H, W)."""
    n, c_in, h, w = x_nchw.shape
    c_out = weight.shape[1]
    hw = h * w

    # Lane-dense view of the pixel axis: pad HW to a multiple of 128 and fold into
    # (rows, 128). The reshape itself is metadata-only; the pad is a no-op when HW is
    # already a multiple of 128 (as for typical square images).
    hw_pad = pl.cdiv(hw, 128) * 128
    r = hw_pad // 128
    x3 = x_nchw.reshape(n, c_in, hw)
    if hw_pad != hw:
        x3 = jnp.pad(x3, ((0, 0), (0, 0), (0, hw_pad - hw)))
    x4 = x3.reshape(n, c_in, r, 128)

    # ConvTranspose2d 1x1: out[co] = sum_ci W[ci, co] * x[ci]; flatten as w[co*C_in+ci].
    w_flat = jnp.transpose(weight[:, :, 0, 0], (1, 0)).reshape(c_out * c_in)
    w_flat = w_flat.astype(jnp.float32)
    b_vec = bias.astype(jnp.float32)

    # Row-tile selection:
    #  * full extent when the plane is tiny (always layout-legal),
    #  * otherwise a multiple of 8 (sublane divisibility), capped at max_tile_rows,
    #  * shrunk if needed so the parallel grid has >= min_blocks blocks (v7x 2 TCs).
    if r <= 8:
        tile_rows = r
    else:
        tile_rows = max(8, (min(max_tile_rows, r) // 8) * 8)
        while tile_rows > 8 and n * pl.cdiv(r, tile_rows) < min_blocks:
            tile_rows = max(8, (tile_rows // 2) // 8 * 8)

    grid = (n, pl.cdiv(r, tile_rows))

    out4 = pl.pallas_call(
        _convt1x1_kernel,
        out_shape=jax.ShapeDtypeStruct((n, c_out, r, 128), x_nchw.dtype),
        grid_spec=pltpu.PrefetchScalarGridSpec(
            num_scalar_prefetch=2,  # weights + bias land in SMEM
            grid=grid,
            in_specs=[
                pl.BlockSpec(
                    (1, c_in, tile_rows, 128),
                    lambda ni, ji, w_r, b_r: (ni, 0, ji, 0),
                ),
            ],
            out_specs=pl.BlockSpec(
                (1, c_out, tile_rows, 128),
                lambda ni, ji, w_r, b_r: (ni, 0, ji, 0),
            ),
        ),
        compiler_params=pltpu.CompilerParams(
            dimension_semantics=("parallel", "parallel"),
            vmem_limit_bytes=32 * 1024 * 1024,
        ),
    )(w_flat, b_vec, x4)

    # Undo the padded lane-dense view (metadata-only when no padding happened).
    out3 = out4.reshape(n, c_out, hw_pad)
    if hw_pad != hw:
        out3 = out3[:, :, :hw]
    return out3.reshape(n, c_out, h, w)


if __name__ == "__main__":
    key = jax.random.PRNGKey(0)
    k_x, k_w, k_b = jax.random.split(key, 3)

    # Small shapes consistent with the module's forward (4-D NCHW input expected by
    # ConvTranspose2d): N=2, C_in=C_out=3, H=W=16.
    N, C_IN, C_OUT, H, W = 2, 3, 3, 16, 16
    x = jax.random.normal(k_x, (N, C_IN, H, W), dtype=jnp.float32)

    # Deterministic parameter init (ConvTranspose2d weight layout: (C_in, C_out, kH, kW)).
    fan_in = C_OUT * 1 * 1
    bound = 1.0 / (fan_in ** 0.5)
    weight = jax.random.uniform(k_w, (C_IN, C_OUT, 1, 1), jnp.float32, -bound, bound)
    bias = jax.random.uniform(k_b, (C_OUT,), jnp.float32, -bound, bound)

    out = conv_transpose2d_1x1(x, weight, bias)
    out = jax.block_until_ready(out)

    # Sanity check against a plain-JAX reference of the same math.
    ref = jnp.einsum("nchw,co->nohw", x, weight[:, :, 0, 0]) + bias[None, :, None, None]
    assert out.shape == (N, C_OUT, H, W)
    assert jnp.allclose(out, ref, atol=1e-5, rtol=1e-5)

    print("KERNEL_OK")
</pallas_src>

<mosaic_0001>
module attributes {stable_mosaic.version = 11 : i64} {
  func.func @_convt1x1_kernel(%arg0: i32, %arg1: i32, %arg2: memref<9xf32, #tpu.memory_space<smem>>, %arg3: memref<3xf32, #tpu.memory_space<smem>>, %arg4: memref<1x3x2x128xf32, #tpu.memory_space<vmem>>, %arg5: memref<1x3x2x128xf32, #tpu.memory_space<vmem>>) attributes {dimension_semantics = [#tpu.dimension_semantics<parallel>, #tpu.dimension_semantics<parallel>], iteration_bounds = array<i64: 2, 1>, scalar_prefetch = 2 : i64, scratch_operands = 0 : i64, tpu.core_type = #tpu.core_type<tc>, window_params = [{transform_indices = @transform_0, window_bounds = array<i64: 1, 3, 2, 128>}, {transform_indices = @transform_1, window_bounds = array<i64: 1, 3, 2, 128>}]} {
    %c0 = arith.constant 0 : index
    %c0_0 = arith.constant 0 : index
    %c0_1 = arith.constant 0 : index
    %c0_2 = arith.constant 0 : index
    %0 = vector.load %arg4[%c0, %c0_0, %c0_1, %c0_2] : memref<1x3x2x128xf32, #tpu.memory_space<vmem>>, vector<1x1x2x128xf32>
    %1 = vector.shape_cast %0 : vector<1x1x2x128xf32> to vector<2x128xf32>
    %c0_3 = arith.constant 0 : index
    %2 = memref.load %arg2[%c0_3] : memref<9xf32, #tpu.memory_space<smem>>
    %3 = vector.broadcast %2 : f32 to vector<2x128xf32>
    %4 = arith.mulf %1, %3 : vector<2x128xf32>
    %c0_4 = arith.constant 0 : index
    %5 = memref.load %arg3[%c0_4] : memref<3xf32, #tpu.memory_space<smem>>
    %6 = vector.broadcast %5 : f32 to vector<2x128xf32>
    %7 = arith.addf %4, %6 : vector<2x128xf32>
    %c0_5 = arith.constant 0 : index
    %c1 = arith.constant 1 : index
    %c0_6 = arith.constant 0 : index
    %c0_7 = arith.constant 0 : index
    %8 = vector.load %arg4[%c0_5, %c1, %c0_6, %c0_7] : memref<1x3x2x128xf32, #tpu.memory_space<vmem>>, vector<1x1x2x128xf32>
    %9 = vector.shape_cast %8 : vector<1x1x2x128xf32> to vector<2x128xf32>
    %c1_8 = arith.constant 1 : index
    %10 = memref.load %arg2[%c1_8] : memref<9xf32, #tpu.memory_space<smem>>
    %11 = vector.broadcast %10 : f32 to vector<2x128xf32>
    %12 = arith.mulf %9, %11 : vector<2x128xf32>
    %13 = arith.addf %7, %12 : vector<2x128xf32>
    %c0_9 = arith.constant 0 : index
    %c2 = arith.constant 2 : index
    %c0_10 = arith.constant 0 : index
    %c0_11 = arith.constant 0 : index
    %14 = vector.load %arg4[%c0_9, %c2, %c0_10, %c0_11] : memref<1x3x2x128xf32, #tpu.memory_space<vmem>>, vector<1x1x2x128xf32>
    %15 = vector.shape_cast %14 : vector<1x1x2x128xf32> to vector<2x128xf32>
    %c2_12 = arith.constant 2 : index
    %16 = memref.load %arg2[%c2_12] : memref<9xf32, #tpu.memory_space<smem>>
    %17 = vector.broadcast %16 : f32 to vector<2x128xf32>
    %18 = arith.mulf %15, %17 : vector<2x128xf32>
    %19 = arith.addf %13, %18 : vector<2x128xf32>
    %c0_13 = arith.constant 0 : index
    %c0_14 = arith.constant 0 : index
    %c0_15 = arith.constant 0 : index
    %c0_16 = arith.constant 0 : index
    %20 = vector.load %arg5[%c0_13, %c0_14, %c0_15, %c0_16] : memref<1x3x2x128xf32, #tpu.memory_space<vmem>>, vector<1x1x2x128xf32>
    %21 = vector.shape_cast %20 : vector<1x1x2x128xf32> to vector<2x128xf32>
    %22 = vector.shape_cast %19 : vector<2x128xf32> to vector<1x1x2x128xf32>
    tpu.vector_store %arg5[%c0_13, %c0_14, %c0_15, %c0_16], %22 {strides = array<i32>} : memref<1x3x2x128xf32, #tpu.memory_space<vmem>>, vector<1x1x2x128xf32>,
    %c0_17 = arith.constant 0 : index
    %c0_18 = arith.constant 0 : index
    %c0_19 = arith.constant 0 : index
    %c0_20 = arith.constant 0 : index
    %23 = vector.load %arg4[%c0_17, %c0_18, %c0_19, %c0_20] : memref<1x3x2x128xf32, #tpu.memory_space<vmem>>, vector<1x1x2x128xf32>
    %24 = vector.shape_cast %23 : vector<1x1x2x128xf32> to vector<2x128xf32>
    %c3 = arith.constant 3 : index
    %25 = memref.load %arg2[%c3] : memref<9xf32, #tpu.memory_space<smem>>
    %26 = vector.broadcast %25 : f32 to vector<2x128xf32>
    %27 = arith.mulf %24, %26 : vector<2x128xf32>
    %c1_21 = arith.constant 1 : index
    %28 = memref.load %arg3[%c1_21] : memref<3xf32, #tpu.memory_space<smem>>
    %29 = vector.broadcast %28 : f32 to vector<2x128xf32>
    %30 = arith.addf %27, %29 : vector<2x128xf32>
    %c0_22 = arith.constant 0 : index
    %c1_23 = arith.constant 1 : index
    %c0_24 = arith.constant 0 : index
    %c0_25 = arith.constant 0 : index
    %31 = vector.load %arg4[%c0_22, %c1_23, %c0_24, %c0_25] : memref<1x3x2x128xf32, #tpu.memory_space<vmem>>, vector<1x1x2x128xf32>
    %32 = vector.shape_cast %31 : vector<1x1x2x128xf32> to vector<2x128xf32>
    %c4 = arith.constant 4 : index
    %33 = memref.load %arg2[%c4] : memref<9xf32, #tpu.memory_space<smem>>
    %34 = vector.broadcast %33 : f32 to vector<2x128xf32>
    %35 = arith.mulf %32, %34 : vector<2x128xf32>
    %36 = arith.addf %30, %35 : vector<2x128xf32>
    %c0_26 = arith.constant 0 : index
    %c2_27 = arith.constant 2 : index
    %c0_28 = arith.constant 0 : index
    %c0_29 = arith.constant 0 : index
    %37 = vector.load %arg4[%c0_26, %c2_27, %c0_28, %c0_29] : memref<1x3x2x128xf32, #tpu.memory_space<vmem>>, vector<1x1x2x128xf32>
    %38 = vector.shape_cast %37 : vector<1x1x2x128xf32> to vector<2x128xf32>
    %c5 = arith.constant 5 : index
    %39 = memref.load %arg2[%c5] : memref<9xf32, #tpu.memory_space<smem>>
    %40 = vector.broadcast %39 : f32 to vector<2x128xf32>
    %41 = arith.mulf %38, %40 : vector<2x128xf32>
    %42 = arith.addf %36, %41 : vector<2x128xf32>
    %c0_30 = arith.constant 0 : index
    %c1_31 = arith.constant 1 : index
    %c0_32 = arith.constant 0 : index
    %c0_33 = arith.constant 0 : index
    %43 = vector.load %arg5[%c0_30, %c1_31, %c0_32, %c0_33] : memref<1x3x2x128xf32, #tpu.memory_space<vmem>>, vector<1x1x2x128xf32>
    %44 = vector.shape_cast %43 : vector<1x1x2x128xf32> to vector<2x128xf32>
    %45 = vector.shape_cast %42 : vector<2x128xf32> to vector<1x1x2x128xf32>
    tpu.vector_store %arg5[%c0_30, %c1_31, %c0_32, %c0_33], %45 {strides = array<i32>} : memref<1x3x2x128xf32, #tpu.memory_space<vmem>>, vector<1x1x2x128xf32>,
    %c0_34 = arith.constant 0 : index
    %c0_35 = arith.constant 0 : index
    %c0_36 = arith.constant 0 : index
    %c0_37 = arith.constant 0 : index
    %46 = vector.load %arg4[%c0_34, %c0_35, %c0_36, %c0_37] : memref<1x3x2x128xf32, #tpu.memory_space<vmem>>, vector<1x1x2x128xf32>
    %47 = vector.shape_cast %46 : vector<1x1x2x128xf32> to vector<2x128xf32>
    %c6 = arith.constant 6 : index
    %48 = memref.load %arg2[%c6] : memref<9xf32, #tpu.memory_space<smem>>
    %49 = vector.broadcast %48 : f32 to vector<2x128xf32>
    %50 = arith.mulf %47, %49 : vector<2x128xf32>
    %c2_38 = arith.constant 2 : index
    %51 = memref.load %arg3[%c2_38] : memref<3xf32, #tpu.memory_space<smem>>
    %52 = vector.broadcast %51 : f32 to vector<2x128xf32>
    %53 = arith.addf %50, %52 : vector<2x128xf32>
    %c0_39 = arith.constant 0 : index
    %c1_40 = arith.constant 1 : index
    %c0_41 = arith.constant 0 : index
    %c0_42 = arith.constant 0 : index
    %54 = vector.load %arg4[%c0_39, %c1_40, %c0_41, %c0_42] : memref<1x3x2x128xf32, #tpu.memory_space<vmem>>, vector<1x1x2x128xf32>
    %55 = vector.shape_cast %54 : vector<1x1x2x128xf32> to vector<2x128xf32>
    %c7 = arith.constant 7 : index
    %56 = memref.load %arg2[%c7] : memref<9xf32, #tpu.memory_space<smem>>
    %57 = vector.broadcast %56 : f32 to vector<2x128xf32>
    %58 = arith.mulf %55, %57 : vector<2x128xf32>
    %59 = arith.addf %53, %58 : vector<2x128xf32>
    %c0_43 = arith.constant 0 : index
    %c2_44 = arith.constant 2 : index
    %c0_45 = arith.constant 0 : index
    %c0_46 = arith.constant 0 : index
    %60 = vector.load %arg4[%c0_43, %c2_44, %c0_45, %c0_46] : memref<1x3x2x128xf32, #tpu.memory_space<vmem>>, vector<1x1x2x128xf32>
    %61 = vector.shape_cast %60 : vector<1x1x2x128xf32> to vector<2x128xf32>
    %c8 = arith.constant 8 : index
    %62 = memref.load %arg2[%c8] : memref<9xf32, #tpu.memory_space<smem>>
    %63 = vector.broadcast %62 : f32 to vector<2x128xf32>
    %64 = arith.mulf %61, %63 : vector<2x128xf32>
    %65 = arith.addf %59, %64 : vector<2x128xf32>
    %c0_47 = arith.constant 0 : index
    %c2_48 = arith.constant 2 : index
    %c0_49 = arith.constant 0 : index
    %c0_50 = arith.constant 0 : index
    %66 = vector.load %arg5[%c0_47, %c2_48, %c0_49, %c0_50] : memref<1x3x2x128xf32, #tpu.memory_space<vmem>>, vector<1x1x2x128xf32>
    %67 = vector.shape_cast %66 : vector<1x1x2x128xf32> to vector<2x128xf32>
    %68 = vector.shape_cast %65 : vector<2x128xf32> to vector<1x1x2x128xf32>
    tpu.vector_store %arg5[%c0_47, %c2_48, %c0_49, %c0_50], %68 {strides = array<i32>} : memref<1x3x2x128xf32, #tpu.memory_space<vmem>>, vector<1x1x2x128xf32>,
    return
  }
  func.func @transform_0(%arg0: i32, %arg1: i32, %arg2: memref<9xf32, #tpu.memory_space<smem>>, %arg3: memref<3xf32, #tpu.memory_space<smem>>) -> (i32, i32, i32, i32) {
    %c0_i32 = arith.constant 0 : i32
    %c0_i32_0 = arith.constant 0 : i32
    %c0_i32_1 = arith.constant 0 : i32
    return %arg0, %c0_i32, %arg1, %c0_i32_0 : i32, i32, i32, i32
  }
  func.func @transform_1(%arg0: i32, %arg1: i32, %arg2: memref<9xf32, #tpu.memory_space<smem>>, %arg3: memref<3xf32, #tpu.memory_space<smem>>) -> (i32, i32, i32, i32) {
    %c0_i32 = arith.constant 0 : i32
    %c0_i32_0 = arith.constant 0 : i32
    %c0_i32_1 = arith.constant 0 : i32
    return %arg0, %c0_i32, %arg1, %c0_i32_0 : i32, i32, i32, i32
  }
}

</mosaic_0001>

<llo_original>
// kernel: tpu_custom_call.1
$region0: #{tpu_custom_call.1}
  #allocation0 [shape = 'u32[]', space=smem, size = 0x4, offset = 0x4, fixed_abs, tag = 'smem constant byte address 0x4 - core index']
  #allocation1 [shape = 'u32[72,128]{1,0:T(1,128)}', space=vmem, size = 0x9000, scoped, tag = 'internal scratch']
  #allocation2 [shape = 's32[1]{0}', space=sflag, size = 0x4, scoped, tag = 'scoped memory for tpu_custom_call.1']
  #allocation3 [shape = 'u8[512]{0}', space=smem, size = 0x200, scoped, tag = 'prefetched SMEM operand 0']
  #allocation4 [shape = 'u8[512]{0}', space=smem, size = 0x200, scoped, tag = 'prefetched SMEM operand 1']
  %s0 = inlined_call_operand.hbm [shape: f32[9], index: 0, kind: input, shape index: {}]
  %s1 = inlined_call_operand.hbm [shape: f32[3], index: 1, kind: input, shape index: {}]
  %s2 = inlined_call_operand.hbm [shape: f32[2,3,2,128], index: 2, kind: input, shape index: {}]
  %s3 = inlined_call_operand.hbm [shape: f32[2,3,2,128], index: 3, kind: output, shape index: {}]
  %s4 = sld [smem:[#allocation0]]
  $region41: #{tpu_custom_call.1} parent=0
    _
  %s6 = ssub.s32 1, %s4
  %s7 = scalar_select 0, %s6, %s4
  %s9 = sshll.u32 %s0, 4
  %s10 = int_to_ptr.hbm [resolvable:$true] %s9
  %12 = dma.hbm_to_smem %s10, 16, [#allocation3], [#allocation2]
  %s14 = sshll.u32 %s1, 4
  %s15 = int_to_ptr.hbm [resolvable:$true] %s14
  %17 = dma.hbm_to_smem %s15, 16, [#allocation4], [#allocation2]
  %19 = dma.done [#allocation2], 32
  %20 = sfence
  $region1: #{tpu_custom_call.1} parent=0
    #allocation5 [shape = 'u8[6144]{0}', space=vmem, size = 0x1800, scoped, tag = 'input window, operand 2']
    #allocation6 [shape = 's32[2]{0}', space=sflag, size = 0x8, scoped, tag = 'scoped memory for tpu_custom_call.1']
    #allocation7 [shape = 's32[2]{0}', space=sflag, size = 0x8, scoped, tag = 'scoped memory for tpu_custom_call.1']
    #allocation8 [shape = 'u8[6144]{0}', space=vmem, size = 0x1800, scoped, tag = 'output window, operand 0']
    %21 = vsyncpa [#allocation6], 0
    %s22 = scalar_lea.sflag [#allocation6], 1
    %23 = vsyncpa %s22, 0
    %24 = vsyncpa [#allocation7], 0
    %s25 = scalar_lea.sflag [#allocation7], 1
    %26 = vsyncpa %s25, 0
    loop: start=0, step=1, limit=4
    $region2: #{tpu_custom_call.1} parent=1 // loop_pre_header
      _
    $region3: #{tpu_custom_call.1} parent=1 // loop_header
      %s28 = sphi 0, %s32
      %p29 = scmp.ge.s32.totalorder %s28, 4
      %s35 = sphi 0, %s47
      %s36 = sphi 0, %s43
      %s37 = sphi 0, %s35
      %s38 = sphi 0, %s36
      %s39 = sphi 0, %s37
      %s40 = sphi 0, %s38
      %s52 = sphi 0, %s54
      %s55 = sphi 0, %s52
      %s56 = sphi 0, %s55
      %s72 = sphi 0, %s56
      %s80 = sphi 0, %s82
      %s83 = sphi 0, %s80
      %s84 = sphi 0, %s83
      %s100 = sphi 0, %s84
    $region4: #{tpu_custom_call.1} parent=1 // loop_header_branch
      %31 = sbr.rel (%p29) target = $region8
    $region5: #{tpu_custom_call.1} parent=1 // loop_body
      %s33 = ssub.s32 %s28, 1
      %s34 = ssub.s32 %s28, 2
      %s41 = sadd.s32 1, %s36
      %p42 = scmp.ge.s32.totalorder %s41, 1
      %s43 = scalar_select %p42, 0, %s41
      %s44 = sadd.s32 1, %s35
      %s45 = scalar_select %p42, %s44, %s35
      %p46 = scmp.ge.s32.totalorder %s45, 2
      %s47 = scalar_select %p46, 0, %s45
      %s48 = ssub.s32 %s35, %s47
      %s49 = ssub.s32 %s36, %s43
      %s50 = sor.u32 %s48, %s49
      %p51 = scmp.eq.s32.totalorder %s50, 0
      %s53 = sadd.s32 %s52, 1
      %s54 = scalar_select %p51, %s52, %s53
      %p57 = pneg %p51
      %p58 = scmp.eq.s32.totalorder %s28, 1
      %p59 = por %p57, %p58
      %p60 = scmp.ne.s32.totalorder %s52, %s55
      %p61 = scmp.eq.s32.totalorder %s28, 0
      %p62 = por %p60, %p61
      %p63 = scmp.ne.s32.totalorder %s52, %s55
      %p64 = scmp.eq.s32.totalorder %s33, 1
      %p65 = por %p63, %p64
      %p66 = scmp.ne.s32.totalorder %s55, %s56
      %p67 = scmp.eq.s32.totalorder %s33, 0
      %p68 = por %p66, %p67
      %p69 = scmp.ne.s32.totalorder %s55, %s56
      %p70 = scmp.eq.s32.totalorder %s34, 1
      %p71 = por %p69, %p70
      %p73 = scmp.ne.s32.totalorder %s56, %s72
      %p74 = scmp.eq.s32.totalorder %s34, 0
      %p75 = por %p73, %p74
      %s76 = ssub.s32 %s35, %s47
      %s77 = ssub.s32 %s36, %s43
      %s78 = sor.u32 %s76, %s77
      %p79 = scmp.eq.s32.totalorder %s78, 0
      %s81 = sadd.s32 %s80, 1
      %s82 = scalar_select %p79, %s80, %s81
      %p85 = pneg %p79
      %p86 = scmp.eq.s32.totalorder %s28, 1
      %p87 = por %p85, %p86
      %p88 = scmp.ne.s32.totalorder %s80, %s83
      %p89 = scmp.eq.s32.totalorder %s28, 0
      %p90 = por %p88, %p89
      %p91 = scmp.ne.s32.totalorder %s80, %s83
      %p92 = scmp.eq.s32.totalorder %s33, 1
      %p93 = por %p91, %p92
      %p94 = scmp.ne.s32.totalorder %s83, %s84
      %p95 = scmp.eq.s32.totalorder %s33, 0
      %p96 = por %p94, %p95
      %p97 = scmp.ne.s32.totalorder %s83, %s84
      %p98 = scmp.eq.s32.totalorder %s34, 1
      %p99 = por %p97, %p98
      %p101 = scmp.ne.s32.totalorder %s84, %s100
      %p102 = scmp.eq.s32.totalorder %s34, 0
      %p103 = por %p101, %p102
      %p104 = scmp.le.s32.totalorder 1, %s28
      %p105 = scmp.lt.s32.totalorder %s28, 3
      %p106 = pnand %p104, %p105
      %p107 = pneg %p106
      // Predicated region
      $region9: #{tpu_custom_call.1} parent=5 // pred_check
        _
      $region10: #{tpu_custom_call.1} parent=5 // pred_check_branch
        %109 = sbr.rel (%p106) target = $region12
      $region11: #{tpu_custom_call.1} parent=5 // pred_region
        %s110 = ssub.s32 %s28, 1
      $region12: #{tpu_custom_call.1} parent=5 // pred_fallthru
        _
      %p111 = scmp.lt.s32.totalorder %s28, 2
      // Predicated region
      $region13: #{tpu_custom_call.1} parent=5 // pred_check
        %p112 = pneg %p111
      $region14: #{tpu_custom_call.1} parent=5 // pred_check_branch
        %114 = sbr.rel (%p112) target = $region16
      $region15: #{tpu_custom_call.1} parent=5 // pred_region
        // Predicated region
        $region17: #{tpu_custom_call.1} parent=15 // pred_check
          %p115 = pneg %p62
        $region18: #{tpu_custom_call.1} parent=15 // pred_check_branch
          %117 = sbr.rel (%p115) target = $region20
        $region19: #{tpu_custom_call.1} parent=15 // pred_region
          %s118 = sand.u32 %s52, 1
          %s119 = scalar_lea.sflag [#allocation6], %s118
          %s120 = sand.u32 %s52, 1
          %s121 = smul.addr %s120, 6
          %s122 = scalar_lea.vmem [#allocation5], %s121
          %124 = vsyncadd %s119, 0
          %s125 = smul.addr %s35, 3
          %s126 = sadd.s32 %s36, %s125
          %s127 = smul.addr %s126, 2
          %s128 = scalar_lea.hbm %s2, %s127
          %s129 = sshll.u32 %s128, 4
          %s130 = int_to_ptr.hbm [resolvable:$true] %s129
          %s131 = sshll.u32 %s122, 4
          %s132 = int_to_ptr.vmem [resolvable:$true] %s131
          %137 = dma.hbm_to_vmem [thread:$0]  %s130, 96, %s132, %s119, 32, 32, 2
        $region20: #{tpu_custom_call.1} parent=15 // pred_fallthru
          _
      $region16: #{tpu_custom_call.1} parent=5 // pred_fallthru
        _
      %p138 = scmp.le.s32.totalorder 1, %s28
      %p139 = scmp.lt.s32.totalorder %s28, 3
      %p140 = pnand %p138, %p139
      %p141 = pneg %p140
      // Predicated region
      $region21: #{tpu_custom_call.1} parent=5 // pred_check
        _
      $region22: #{tpu_custom_call.1} parent=5 // pred_check_branch
        %143 = sbr.rel (%p140) target = $region24
      $region23: #{tpu_custom_call.1} parent=5 // pred_region
        %s144 = ssub.s32 %s28, 1
        %s145 = sand.u32 %s55, 1
        %s146 = scalar_lea.sflag [#allocation6], %s145
        %s147 = sand.u32 %s55, 1
        %s148 = smul.addr %s147, 6
        %s149 = scalar_lea.vmem [#allocation5], %s148
        // Predicated region
        $region25: #{tpu_custom_call.1} parent=23 // pred_check
          %p150 = pneg %p68
        $region26: #{tpu_custom_call.1} parent=23 // pred_check_branch
          %152 = sbr.rel (%p150) target = $region28
        $region27: #{tpu_custom_call.1} parent=23 // pred_region
          %154 = dma.done %s146, 96
        $region28: #{tpu_custom_call.1} parent=23 // pred_fallthru
          _
        %s155 = sand.u32 %s55, 1
        %s156 = scalar_lea.sflag [#allocation6], %s155
        %s157 = sand.u32 %s55, 1
        %s158 = smul.addr %s157, 6
        %s159 = scalar_lea.vmem [#allocation5], %s158
        %p160 = pneg %p68
        %p161 = pneg %p65
        %p162 = pneg %p96
        %p163 = pneg %p93
        %s164 = sand.u32 %s83, 1
        %s165 = scalar_lea.sflag [#allocation7], %s164
        %s166 = sand.u32 %s83, 1
        %s167 = smul.addr %s166, 6
        %s168 = scalar_lea.vmem [#allocation8], %s167
        %v169 = vld [vmem:[%s149] sm:$0x3]
        %s170 = sld [smem:[#allocation3]]
        %v171 = vstv %s170
        %v172 = vmul.f32 %v169, %v171
        %s173 = sld [smem:[#allocation4]]
        %v174 = vstv %s173
        %v175 = vadd.f32 %v172, %v174
        %s176 = scalar_lea.vmem %s149, 2 [#allocation5]
        %v177 = vld [vmem:[%s176] sm:$0x3]
        %s178 = sld [smem:[#allocation3 + $0x1]]
        %v179 = vstv %s178
        %v180 = vmul.f32 %v177, %v179
        %v181 = vadd.f32 %v175, %v180
        %s182 = scalar_lea.vmem %s149, 4 [#allocation5]
        %v183 = vld [vmem:[%s182] sm:$0x3]
        %s184 = sld [smem:[#allocation3 + $0x2]]
        %v185 = vstv %s184
        %v186 = vmul.f32 %v183, %v185
        %v187 = vadd.f32 %v181, %v186
        %188 = vst [vmem:[%s168] sm:$0x3] %v187
        %v189 = vld [vmem:[%s149] sm:$0x3]
        %s190 = sld [smem:[#allocation3 + $0x3]]
        %v191 = vstv %s190
        %v192 = vmul.f32 %v189, %v191
        %s193 = sld [smem:[#allocation4 + $0x1]]
        %v194 = vstv %s193
        %v195 = vadd.f32 %v192, %v194
        %v196 = vld [vmem:[%s176] sm:$0x3]
        %s197 = sld [smem:[#allocation3 + $0x4]]
        %v198 = vstv %s197
        %v199 = vmul.f32 %v196, %v198
        %v200 = vadd.f32 %v195, %v199
        %v201 = vld [vmem:[%s182] sm:$0x3]
        %s202 = sld [smem:[#allocation3 + $0x5]]
        %v203 = vstv %s202
        %v204 = vmul.f32 %v201, %v203
        %v205 = vadd.f32 %v200, %v204
        %s206 = scalar_lea.vmem %s168, 2 [#allocation8]
        %207 = vst [vmem:[%s206] sm:$0x3] %v205
        %v208 = vld [vmem:[%s149] sm:$0x3]
        %s209 = sld [smem:[#allocation3 + $0x6]]
        %v210 = vstv %s209
        %v211 = vmul.f32 %v208, %v210
        %s212 = sld [smem:[#allocation4 + $0x2]]
        %v213 = vstv %s212
        %v214 = vadd.f32 %v211, %v213
        %v215 = vld [vmem:[%s176] sm:$0x3]
        %s216 = sld [smem:[#allocation3 + $0x7]]
        %v217 = vstv %s216
        %v218 = vmul.f32 %v215, %v217
        %v219 = vadd.f32 %v214, %v218
        %v220 = vld [vmem:[%s182] sm:$0x3]
        %s221 = sld [smem:[#allocation3 + $0x8]]
        %v222 = vstv %s221
        %v223 = vmul.f32 %v220, %v222
        %v224 = vadd.f32 %v219, %v223
        %s225 = scalar_lea.vmem %s168, 4 [#allocation8]
        %226 = vst [vmem:[%s225] sm:$0x3] %v224
        %s227 = sand.u32 %s83, 1
        %s228 = scalar_lea.sflag [#allocation7], %s227
        %s229 = sand.u32 %s83, 1
        %s230 = smul.addr %s229, 6
        %s231 = scalar_lea.vmem [#allocation8], %s230
        // Predicated region
        $region29: #{tpu_custom_call.1} parent=23 // pred_check
          %p232 = pneg %p93
        $region30: #{tpu_custom_call.1} parent=23 // pred_check_branch
          %234 = sbr.rel (%p232) target = $region32
        $region31: #{tpu_custom_call.1} parent=23 // pred_region
          %236 = vsyncadd %s228, 0
          %s237 = smul.addr %s37, 3
          %s238 = sadd.s32 %s38, %s237
          %s239 = smul.addr %s238, 2
          %s240 = scalar_lea.hbm %s3, %s239
          %s241 = sshll.u32 %s231, 4
          %s242 = int_to_ptr.vmem [resolvable:$true] %s241
          %s243 = sshll.u32 %s240, 4
          %s244 = int_to_ptr.hbm [resolvable:$true] %s243
          %249 = dma.vmem_to_hbm [thread:$0]  %s242, 96, %s244, %s228, 32, 32, 2
        $region32: #{tpu_custom_call.1} parent=23 // pred_fallthru
          _
      $region24: #{tpu_custom_call.1} parent=5 // pred_fallthru
        _
      %p250 = scmp.le.s32.totalorder 2, %s28
      // Predicated region
      $region33: #{tpu_custom_call.1} parent=5 // pred_check
        %p251 = pneg %p250
      $region34: #{tpu_custom_call.1} parent=5 // pred_check_branch
        %253 = sbr.rel (%p251) target = $region36
      $region35: #{tpu_custom_call.1} parent=5 // pred_region
        %s254 = ssub.s32 %s28, 2
        // Predicated region
        $region37: #{tpu_custom_call.1} parent=35 // pred_check
          %p255 = pneg %p99
        $region38: #{tpu_custom_call.1} parent=35 // pred_check_branch
          %257 = sbr.rel (%p255) target = $region40
        $region39: #{tpu_custom_call.1} parent=35 // pred_region
          %s258 = sand.u32 %s84, 1
          %s259 = scalar_lea.sflag [#allocation7], %s258
          %s260 = sand.u32 %s84, 1
          %s261 = smul.addr %s260, 6
          %s262 = scalar_lea.vmem [#allocation8], %s261
          %264 = dma.done %s259, 96
        $region40: #{tpu_custom_call.1} parent=35 // pred_fallthru
          _
      $region36: #{tpu_custom_call.1} parent=5 // pred_fallthru
        _
    $region6: #{tpu_custom_call.1} parent=1 // loop_footer
      %s32 = sadd.s32 1, %s28
    $region7: #{tpu_custom_call.1} parent=1 // loop_footer_branch
      %27 = sbr.rel target = $region3
    $region8: #{tpu_custom_call.1} parent=1 // loop_exit
      _
    %265 = vsyncpa [#allocation6], 1
    %s266 = scalar_lea.sflag [#allocation6], 1
    %267 = vsyncpa %s266, 1
    %268 = vsyncpa [#allocation7], 1
    %s269 = scalar_lea.sflag [#allocation7], 1
    %270 = vsyncpa %s269, 1

</llo_original>
